<compile_context>
chip_gen: v6e
topology: v6e:2x2x1
jax: 0.10.0
libtpu: 0.0.40
codegen_flags: <defaults>
</compile_context>

<pallas_src>
import functools

import jax
import jax.numpy as jnp
from jax.experimental import pallas as pl
from jax.experimental.pallas import tpu as pltpu


def mdn_kernel(x_ref, w1_ref, b1_ref, w2_ref, b2_ref, out_ref, *, n_components):
    K = n_components
    x = x_ref[...]

    # --- BatchNorm1d(n_input, affine=False), training mode ---
    mean = jnp.mean(x, axis=0, keepdims=True)
    var = jnp.mean((x - mean) ** 2, axis=0, keepdims=True)  # biased variance
    xn = (x - mean) * jax.lax.rsqrt(var + 1e-5)

    # --- Linear(n_input, n_hidden) + ELU(alpha=1) ---
    # Padded hidden columns have zero weights/bias -> h = 0 -> ELU(0) = 0.
    h = jnp.dot(xn, w1_ref[...], preferred_element_type=jnp.float32) + b1_ref[...]
    hn = jnp.minimum(h, 0.0)
    # expm1(hn) computed exactly as tanh(hn/2) * (exp(hn) + 1): accurate near 0,
    # no overflow on the (discarded) positive branch.
    elu_neg = jnp.tanh(0.5 * hn) * (jnp.exp(hn) + 1.0)
    h = jnp.where(h > 0, h, elu_neg)

    # --- Linear(n_hidden, 3*K); columns pre-permuted to [pi | mu | log_sigma | pad] ---
    o = jnp.dot(h, w2_ref[...], preferred_element_type=jnp.float32) + b2_ref[...]

    col = jax.lax.broadcasted_iota(jnp.int32, o.shape, dimension=1)
    is_pi = col < K
    is_mu = (col >= K) & (col < 2 * K)
    is_ls = (col >= 2 * K) & (col < 3 * K)

    # softmax over the K mixture-weight columns (masked on the padded slab)
    logits = jnp.where(is_pi, o, -1e30)
    m = jnp.max(logits, axis=-1, keepdims=True)
    e = jnp.exp(logits - m)                      # masked lanes -> exp(-huge) = 0
    inv_denom = pl.reciprocal(jnp.sum(e, axis=-1, keepdims=True), approx=True)
    pi = e * inv_denom

    sigma = jnp.exp(jnp.clip(o, -20.0, 20.0))

    # Single lane-dense store of the fused [pi | mu | sigma | 0-pad] slab.
    out_ref[...] = jnp.where(is_pi, pi, jnp.where(is_mu, o, jnp.where(is_ls, sigma, 0.0)))


def prepare_mdn_params(w1, b1, w2, b2, n_components, lane_pad=128):
    """One-time parameter preparation (do NOT call per forward step).

    - Permutes the second Linear's output columns from the interleaved
      (comp*3 + field) layout to the blocked (field*K + comp) layout so the
      kernel/wrapper can take contiguous slices.
    - Zero-pads the hidden dim and the output dim up to lane multiples (128)
      so both matmuls are clean MXU tiles and the output store is unmasked.
    """
    n_input, n_hidden = w1.shape
    K = n_components
    assert w2.shape == (n_hidden, 3 * K) and b2.shape == (3 * K,)

    hp = max(lane_pad, -(-n_hidden // lane_pad) * lane_pad)   # padded hidden dim
    op = max(lane_pad, -(-(3 * K) // lane_pad) * lane_pad)    # padded output dim

    # new column (field*K + comp)  <-  original column (comp*3 + field)
    perm = jnp.array([c * 3 + f for f in range(3) for c in range(K)], dtype=jnp.int32)
    w2p = w2[:, perm]
    b2p = b2[perm]

    w1_pad = jnp.zeros((n_input, hp), jnp.float32).at[:, :n_hidden].set(w1)
    b1_pad = jnp.zeros((1, hp), jnp.float32).at[:, :n_hidden].set(b1)
    w2_pad = jnp.zeros((hp, op), jnp.float32).at[:n_hidden, :3 * K].set(w2p)
    b2_pad = jnp.zeros((1, op), jnp.float32).at[:, :3 * K].set(b2p)

    return (w1_pad, b1_pad, w2_pad, b2_pad)


def mdn_forward(x, params, n_components):
    """x: (B, n_input) f32, params from prepare_mdn_params.
    Returns (pi, mu, sigma), each (B, n_components)."""
    w1p, b1p, w2p, b2p = params
    B = x.shape[0]
    K = n_components
    opad = w2p.shape[1]

    vmem = pl.BlockSpec(memory_space=pltpu.MemorySpace.VMEM)

    out = pl.pallas_call(
        functools.partial(mdn_kernel, n_components=K),
        out_shape=jax.ShapeDtypeStruct((B, opad), jnp.float32),
        in_specs=[vmem, vmem, vmem, vmem, vmem],
        out_specs=vmem,
    )(x, w1p, b1p, w2p, b2p)

    # Wrapper-side slicing of the fused lane-dense slab (free layout plumbing).
    pi = out[:, 0:K]
    mu = out[:, K:2 * K]
    sigma = out[:, 2 * K:3 * K]
    return pi, mu, sigma


if __name__ == "__main__":
    # Small shapes consistent with the module: batch=8, n_input=16, n_hidden=32, K=3
    B, n_input, n_hidden, K = 8, 16, 32, 3

    key = jax.random.PRNGKey(0)
    kx, k1, k2, k3, k4 = jax.random.split(key, 5)

    x = jax.random.normal(kx, (B, n_input), dtype=jnp.float32)

    # Deterministic parameter init (uniform, roughly PyTorch Linear scale).
    lim1 = 1.0 / (n_input ** 0.5)
    w1 = jax.random.uniform(k1, (n_input, n_hidden), jnp.float32, -lim1, lim1)
    b1 = jax.random.uniform(k2, (n_hidden,), jnp.float32, -lim1, lim1)
    lim2 = 1.0 / (n_hidden ** 0.5)
    w2 = jax.random.uniform(k3, (n_hidden, 3 * K), jnp.float32, -lim2, lim2)
    b2 = jax.random.uniform(k4, (3 * K,), jnp.float32, -lim2, lim2)

    # Parameter prep happens once (permutation + padding hoisted out of forward).
    params = prepare_mdn_params(w1, b1, w2, b2, n_components=K)

    pi, mu, sigma = mdn_forward(x, params, n_components=K)
    jax.block_until_ready((pi, mu, sigma))

    assert pi.shape == (B, K) and mu.shape == (B, K) and sigma.shape == (B, K)
    assert bool(jnp.all(jnp.isfinite(pi)) & jnp.all(jnp.isfinite(mu))
                & jnp.all(jnp.isfinite(sigma)))
    print("KERNEL_OK")
</pallas_src>

<mosaic_0001>
module attributes {stable_mosaic.version = 11 : i64} {
  func.func @mdn_kernel(%arg0: memref<8x16xf32, #tpu.memory_space<vmem>>, %arg1: memref<16x128xf32, #tpu.memory_space<vmem>>, %arg2: memref<1x128xf32, #tpu.memory_space<vmem>>, %arg3: memref<128x128xf32, #tpu.memory_space<vmem>>, %arg4: memref<1x128xf32, #tpu.memory_space<vmem>>, %arg5: memref<8x128xf32, #tpu.memory_space<vmem>>) attributes {dimension_semantics = [], scalar_prefetch = 0 : i64, scratch_operands = 0 : i64, tpu.core_type = #tpu.core_type<tc>} {
    %c0 = arith.constant 0 : index
    %c0_0 = arith.constant 0 : index
    %0 = vector.load %arg0[%c0, %c0_0] : memref<8x16xf32, #tpu.memory_space<vmem>>, vector<8x16xf32>
    %cst = arith.constant dense<0.000000e+00> : vector<16xf32>
    %1 = vector.multi_reduction <add>, %0, %cst [0] : vector<8x16xf32> to vector<16xf32>
    %2 = vector.shape_cast %1 : vector<16xf32> to vector<1x16xf32>
    %cst_1 = arith.constant 8.000000e+00 : f32
    %3 = vector.broadcast %cst_1 : f32 to vector<1x16xf32>
    %4 = arith.divf %2, %3 : vector<1x16xf32>
    %5 = vector.broadcast %4 : vector<1x16xf32> to vector<8x16xf32>
    %6 = arith.subf %0, %5 : vector<8x16xf32>
    %7 = arith.mulf %6, %6 : vector<8x16xf32>
    %cst_2 = arith.constant dense<0.000000e+00> : vector<16xf32>
    %8 = vector.multi_reduction <add>, %7, %cst_2 [0] : vector<8x16xf32> to vector<16xf32>
    %9 = vector.shape_cast %8 : vector<16xf32> to vector<1x16xf32>
    %cst_3 = arith.constant 8.000000e+00 : f32
    %10 = vector.broadcast %cst_3 : f32 to vector<1x16xf32>
    %11 = arith.divf %9, %10 : vector<1x16xf32>
    %12 = vector.broadcast %4 : vector<1x16xf32> to vector<8x16xf32>
    %13 = arith.subf %0, %12 : vector<8x16xf32>
    %cst_4 = arith.constant 9.99999974E-6 : f32
    %14 = vector.broadcast %cst_4 : f32 to vector<1x16xf32>
    %15 = arith.addf %11, %14 : vector<1x16xf32>
    %16 = math.rsqrt %15 : vector<1x16xf32>
    %17 = vector.broadcast %16 : vector<1x16xf32> to vector<8x16xf32>
    %18 = arith.mulf %13, %17 : vector<8x16xf32>
    %c0_5 = arith.constant 0 : index
    %c0_6 = arith.constant 0 : index
    %19 = vector.load %arg1[%c0_5, %c0_6] : memref<16x128xf32, #tpu.memory_space<vmem>>, vector<16x128xf32>
    %cst_7 = arith.constant dense<0.000000e+00> : vector<8x128xf32>
    %20 = tpu.matmul %18, %19, %cst_7 {dimension_numbers = #tpu.dot_dimension_numbers<[1], [0], [0], [1], [0, 0, 1, 1], [], []>} : vector<8x16xf32>, vector<16x128xf32>, vector<8x128xf32> -> vector<8x128xf32>
    %c0_8 = arith.constant 0 : index
    %c0_9 = arith.constant 0 : index
    %21 = vector.load %arg2[%c0_8, %c0_9] : memref<1x128xf32, #tpu.memory_space<vmem>>, vector<1x128xf32>
    %22 = vector.broadcast %21 : vector<1x128xf32> to vector<8x128xf32>
    %23 = arith.addf %20, %22 : vector<8x128xf32>
    %cst_10 = arith.constant 0.000000e+00 : f32
    %24 = vector.broadcast %cst_10 : f32 to vector<8x128xf32>
    %25 = arith.minimumf %23, %24 : vector<8x128xf32>
    %cst_11 = arith.constant 5.000000e-01 : f32
    %26 = vector.broadcast %cst_11 : f32 to vector<8x128xf32>
    %27 = arith.mulf %26, %25 : vector<8x128xf32>
    %28 = math.tanh %27 : vector<8x128xf32>
    %29 = math.exp %25 : vector<8x128xf32>
    %cst_12 = arith.constant 1.000000e+00 : f32
    %30 = vector.broadcast %cst_12 : f32 to vector<8x128xf32>
    %31 = arith.addf %29, %30 : vector<8x128xf32>
    %32 = arith.mulf %28, %31 : vector<8x128xf32>
    %cst_13 = arith.constant 0.000000e+00 : f32
    %33 = vector.broadcast %cst_13 : f32 to vector<8x128xf32>
    %34 = arith.cmpf ogt, %23, %33 : vector<8x128xf32>
    %35 = arith.select %34, %23, %32 : vector<8x128xi1>, vector<8x128xf32>
    %c0_14 = arith.constant 0 : index
    %c0_15 = arith.constant 0 : index
    %36 = vector.load %arg3[%c0_14, %c0_15] : memref<128x128xf32, #tpu.memory_space<vmem>>, vector<128x128xf32>
    %cst_16 = arith.constant dense<0.000000e+00> : vector<8x128xf32>
    %37 = tpu.matmul %35, %36, %cst_16 {dimension_numbers = #tpu.dot_dimension_numbers<[1], [0], [0], [1], [0, 0, 1, 1], [], []>} : vector<8x128xf32>, vector<128x128xf32>, vector<8x128xf32> -> vector<8x128xf32>
    %c0_17 = arith.constant 0 : index
    %c0_18 = arith.constant 0 : index
    %38 = vector.load %arg4[%c0_17, %c0_18] : memref<1x128xf32, #tpu.memory_space<vmem>>, vector<1x128xf32>
    %39 = vector.broadcast %38 : vector<1x128xf32> to vector<8x128xf32>
    %40 = arith.addf %37, %39 : vector<8x128xf32>
    %41 = tpu.iota {dimensions = array<i32: 1>} : vector<8x128xi32>
    %c3_i32 = arith.constant 3 : i32
    %42 = vector.broadcast %c3_i32 : i32 to vector<8x128xi32>
    %43 = arith.cmpi slt, %41, %42 : vector<8x128xi32>
    %c3_i32_19 = arith.constant 3 : i32
    %44 = vector.broadcast %c3_i32_19 : i32 to vector<8x128xi32>
    %45 = arith.cmpi sge, %41, %44 : vector<8x128xi32>
    %c6_i32 = arith.constant 6 : i32
    %46 = vector.broadcast %c6_i32 : i32 to vector<8x128xi32>
    %47 = arith.cmpi slt, %41, %46 : vector<8x128xi32>
    %48 = arith.andi %45, %47 : vector<8x128xi1>
    %c6_i32_20 = arith.constant 6 : i32
    %49 = vector.broadcast %c6_i32_20 : i32 to vector<8x128xi32>
    %50 = arith.cmpi sge, %41, %49 : vector<8x128xi32>
    %c9_i32 = arith.constant 9 : i32
    %51 = vector.broadcast %c9_i32 : i32 to vector<8x128xi32>
    %52 = arith.cmpi slt, %41, %51 : vector<8x128xi32>
    %53 = arith.andi %50, %52 : vector<8x128xi1>
    %cst_21 = arith.constant -1.000000e+30 : f32
    %54 = vector.broadcast %cst_21 : f32 to vector<8x128xf32>
    %55 = arith.select %43, %40, %54 : vector<8x128xi1>, vector<8x128xf32>
    %cst_22 = arith.constant dense<0xFF800000> : vector<8xf32>
    %56 = vector.multi_reduction <maximumf>, %55, %cst_22 [1] : vector<8x128xf32> to vector<8xf32>
    %57 = vector.shape_cast %56 : vector<8xf32> to vector<8x1xf32>
    %58 = vector.broadcast %57 : vector<8x1xf32> to vector<8x128xf32>
    %59 = arith.subf %55, %58 : vector<8x128xf32>
    %60 = math.exp %59 : vector<8x128xf32>
    %cst_23 = arith.constant dense<0.000000e+00> : vector<8xf32>
    %61 = vector.multi_reduction <add>, %60, %cst_23 [1] : vector<8x128xf32> to vector<8xf32>
    %62 = vector.shape_cast %61 : vector<8xf32> to vector<8x1xf32>
    %63 = tpu.reciprocal %62 {approx = true} : vector<8x1xf32> -> vector<8x1xf32>
    %64 = vector.broadcast %63 : vector<8x1xf32> to vector<8x128xf32>
    %65 = arith.mulf %60, %64 : vector<8x128xf32>
    %cst_24 = arith.constant -2.000000e+01 : f32
    %cst_25 = arith.constant 2.000000e+01 : f32
    %66 = vector.broadcast %cst_24 : f32 to vector<8x128xf32>
    %67 = arith.maximumf %66, %40 : vector<8x128xf32>
    %68 = vector.broadcast %cst_25 : f32 to vector<8x128xf32>
    %69 = arith.minimumf %68, %67 : vector<8x128xf32>
    %70 = math.exp %69 : vector<8x128xf32>
    %cst_26 = arith.constant 0.000000e+00 : f32
    %71 = vector.broadcast %cst_26 : f32 to vector<8x128xf32>
    %72 = arith.select %53, %70, %71 : vector<8x128xi1>, vector<8x128xf32>
    %73 = arith.select %48, %40, %72 : vector<8x128xi1>, vector<8x128xf32>
    %74 = arith.select %43, %65, %73 : vector<8x128xi1>, vector<8x128xf32>
    %c0_27 = arith.constant 0 : index
    %c0_28 = arith.constant 0 : index
    %75 = vector.load %arg5[%c0_27, %c0_28] : memref<8x128xf32, #tpu.memory_space<vmem>>, vector<8x128xf32>
    tpu.vector_store %arg5[%c0_27, %c0_28], %74 {strides = array<i32>} : memref<8x128xf32, #tpu.memory_space<vmem>>, vector<8x128xf32>,
    return
  }
}

</mosaic_0001>

<llo_original>
// kernel: tpu_custom_call.1
$region0: #{tpu_custom_call.1}
  #allocation0 [shape = 'u32[]', space=smem, size = 0x4, offset = 0x4, fixed_abs, tag = 'smem constant byte address 0x4 - core index']
  #allocation1 [shape = 'u32[144,128]{1,0:T(1,128)}', space=vmem, size = 0x12000, scoped, tag = 'internal scratch']
  %s0 = inlined_call_operand.hbm [shape: f32[8,16], index: 0, kind: input, shape index: {}]
  %s1 = inlined_call_operand.hbm [shape: f32[16,128], index: 1, kind: input, shape index: {}]
  %s2 = inlined_call_operand.vmem [shape: f32[1,128], index: 2, kind: input, shape index: {}]
  %s3 = inlined_call_operand.hbm [shape: f32[128,128], index: 3, kind: input, shape index: {}]
  %s4 = inlined_call_operand.vmem [shape: f32[1,128], index: 4, kind: input, shape index: {}]
  %s5 = inlined_call_operand.hbm [shape: f32[8,128], index: 5, kind: output, shape index: {}]
  %s6 = sld [smem:[#allocation0]]
  $region42: #{tpu_custom_call.1} parent=0
    _
  %s8 = ssub.s32 1, %s6
  %s9 = scalar_select 0, %s8, %s6
  $region1: #{tpu_custom_call.1} parent=0
    #allocation2 [shape = 'u8[4096]{0}', space=vmem, size = 0x1000, scoped, tag = 'input window, operand 0, single buffered']
    #allocation3 [shape = 's32[1]{0}', space=sflag, size = 0x4, scoped, tag = 'scoped memory for tpu_custom_call.1']
    #allocation4 [shape = 's32[1]{0}', space=sflag, size = 0x4, scoped, tag = 'scoped memory for tpu_custom_call.1']
    #allocation5 [shape = 'u8[8192]{0}', space=vmem, size = 0x2000, scoped, tag = 'input window, operand 1, single buffered']
    #allocation6 [shape = 's32[1]{0}', space=sflag, size = 0x4, scoped, tag = 'scoped memory for tpu_custom_call.1']
    #allocation7 [shape = 'u8[65536]{0}', space=vmem, size = 0x10000, scoped, tag = 'input window, operand 3, single buffered']
    #allocation8 [shape = 'u8[4096]{0}', space=vmem, size = 0x1000, scoped, tag = 'output window, operand 0, single buffered']
    %10 = vsyncpa [#allocation3], 0
    %11 = vsyncpa [#allocation6], 0
    %12 = vsyncpa [#allocation4], 0
    // Predicated region
    $region2: #{tpu_custom_call.1} parent=1 // pred_check
      _
    $region3: #{tpu_custom_call.1} parent=1 // pred_check_branch
      %14 = sbr.rel (0) target = $region5
    $region4: #{tpu_custom_call.1} parent=1 // pred_region
      %s16 = ssub.s32 128, 128
      %17 = vsyncadd [#allocation3], %s16
      %s19 = sshll.u32 [#allocation2], 4
      %s20 = int_to_ptr.vmem [resolvable:$true] %s19
      %22 = dma.hbm_to_vmem [thread:$0]  %s0, 128, %s20, [#allocation3]
    $region5: #{tpu_custom_call.1} parent=1 // pred_fallthru
      _
    // Predicated region
    $region6: #{tpu_custom_call.1} parent=1 // pred_check
      _
    $region7: #{tpu_custom_call.1} parent=1 // pred_check_branch
      %24 = sbr.rel (0) target = $region9
    $region8: #{tpu_custom_call.1} parent=1 // pred_region
      %s26 = ssub.s32 256, 256
      %27 = vsyncadd [#allocation6], %s26
      %s28 = sshll.u32 [#allocation5], 4
      %s29 = int_to_ptr.vmem [resolvable:$true] %s28
      %34 = dma.hbm_to_vmem [thread:$0]  %s1, 256, %s29, [#allocation6], 128, 128, 8
    $region9: #{tpu_custom_call.1} parent=1 // pred_fallthru
      _
    // Predicated region
    $region10: #{tpu_custom_call.1} parent=1 // pred_check
      _
    $region11: #{tpu_custom_call.1} parent=1 // pred_check_branch
      %36 = sbr.rel (0) target = $region13
    $region12: #{tpu_custom_call.1} parent=1 // pred_region
      _
    $region13: #{tpu_custom_call.1} parent=1 // pred_fallthru
      _
    // Predicated region
    $region14: #{tpu_custom_call.1} parent=1 // pred_check
      _
    $region15: #{tpu_custom_call.1} parent=1 // pred_check_branch
      %38 = sbr.rel (0) target = $region17
    $region16: #{tpu_custom_call.1} parent=1 // pred_region
      %s40 = ssub.s32 2048, 2048
      %41 = vsyncadd [#allocation6], %s40
      %s42 = sshll.u32 [#allocation7], 4
      %s43 = int_to_ptr.vmem [resolvable:$true] %s42
      %48 = dma.hbm_to_vmem [thread:$0]  %s3, 2048, %s43, [#allocation6], 128, 128, 8
    $region17: #{tpu_custom_call.1} parent=1 // pred_fallthru
      _
    // Predicated region
    $region18: #{tpu_custom_call.1} parent=1 // pred_check
      _
    $region19: #{tpu_custom_call.1} parent=1 // pred_check_branch
      %50 = sbr.rel (0) target = $region21
    $region20: #{tpu_custom_call.1} parent=1 // pred_region
      _
    $region21: #{tpu_custom_call.1} parent=1 // pred_fallthru
      _
    // Predicated region
    $region22: #{tpu_custom_call.1} parent=1 // pred_check
      _
    $region23: #{tpu_custom_call.1} parent=1 // pred_check_branch
      %52 = sbr.rel (0) target = $region25
    $region24: #{tpu_custom_call.1} parent=1 // pred_region
      %53 = dma.done [#allocation3], 128
    $region25: #{tpu_custom_call.1} parent=1 // pred_fallthru
      _
    // Predicated region
    $region26: #{tpu_custom_call.1} parent=1 // pred_check
      _
    $region27: #{tpu_custom_call.1} parent=1 // pred_check_branch
      %55 = sbr.rel (0) target = $region29
    $region28: #{tpu_custom_call.1} parent=1 // pred_region
      %56 = dma.done [#allocation6], 256
    $region29: #{tpu_custom_call.1} parent=1 // pred_fallthru
      _
    // Predicated region
    $region30: #{tpu_custom_call.1} parent=1 // pred_check
      _
    $region31: #{tpu_custom_call.1} parent=1 // pred_check_branch
      %58 = sbr.rel (0) target = $region33
    $region32: #{tpu_custom_call.1} parent=1 // pred_region
      %59 = dma.done [#allocation6], 2048
    $region33: #{tpu_custom_call.1} parent=1 // pred_fallthru
      _
    %v60 = vld [vmem:[#allocation2] sm:$0xff]
    %vm61 = vcmask 130048
    %v62 = vsel %vm61, %v60, 0.0
    %v63 = vrot.slane %v62, 4
    %v64 = vadd.f32 %v62, %v63
    %v65 = vrot.slane %v64, 2
    %v66 = vadd.f32 %v64, %v65
    %v67 = vrot.slane %v66, 1
    %v68 = vadd.f32 %v66, %v67
    %v69 = vrcp.pop 8.0
    %v70 = vmul.f32 %v68, %v69
    %v71 = vsub.f32 %v60, %v70
    %v72 = vmul.f32 %v71, %v71
    %v73 = vsel %vm61, %v72, 0.0
    %v74 = vrot.slane %v73, 4
    %v75 = vadd.f32 %v73, %v74
    %v76 = vrot.slane %v75, 2
    %v77 = vadd.f32 %v75, %v76
    %v78 = vrot.slane %v77, 1
    %v79 = vadd.f32 %v77, %v78
    %v80 = vmul.f32 %v79, %v69
    %v81 = vadd.f32 %v80, 1e-05
    %v82 = vrsqrt.pop %v81
    %v83 = vmul.f32 %v71, %v82
    %v84 = vld [vmem:[#allocation5] sm:$0xff]
    %v85 = vld [vmem:[#allocation5 + $0x8] sm:$0xff]
    %v86 = vld [vmem:[%s2] sm:$0x1]
    %v88 = vlaneseq
    %v89 = vshrl.u32 %v88, 7
    %v90 = vsub.s32 0, %v89
    %v91 = vrot.slane %v86, %v90
    %v94 = vsel %vm61, %v83, 0
    %96 = vmatprep.subr.mxu0 0.0
    %97 = vmatpush1.msra.mxu0 0.0
    %98 = vmatprep.subr.mxu0 0.0
    %99 = vmatpush1.msra.mxu0 0.0
    %100 = vmatprep.subr.mxu0 0.0
    %101 = vmatpush1.msra.mxu0 0.0
    %102 = vmatprep.subr.mxu0 0.0
    %103 = vmatpush1.msra.mxu0 0.0
    %104 = vmatprep.subr.mxu0 0.0
    %105 = vmatpush1.msra.mxu0 0.0
    %106 = vmatprep.subr.mxu0 0.0
    %107 = vmatpush1.msra.mxu0 0.0
    %108 = vmatprep.subr.mxu0 0.0
    %109 = vmatpush1.msra.mxu0 0.0
    %110 = vmatprep.subr.mxu0 0.0
    %111 = vmatpush1.msra.mxu0 0.0
    %112 = vmatprep.subr.mxu0 0.0
    %113 = vmatpush1.msra.mxu0 0.0
    %114 = vmatprep.subr.mxu0 0.0
    %115 = vmatpush1.msra.mxu0 0.0
    %116 = vmatprep.subr.mxu0 0.0
    %117 = vmatpush1.msra.mxu0 0.0
    %118 = vmatprep.subr.mxu0 0.0
    %119 = vmatpush1.msra.mxu0 0.0
    %120 = vmatprep.subr.mxu0 0.0
    %121 = vmatpush1.msra.mxu0 0.0
    %122 = vmatprep.subr.mxu0 0.0
    %123 = vmatpush1.msra.mxu0 0.0
    %124 = vmatprep.subr.mxu0 0.0
    %125 = vmatpush1.msra.mxu0 %v85
    %126 = vmatprep.subr.mxu0 0.0
    %127 = vmatpush1.msra.mxu0 %v84
    %128 = vmatprep.subr.mxu0 0.0
    %129 = vmatpush2.msra.mxu0 0.0
    %130 = vmatprep.subr.mxu0 0.0
    %131 = vmatpush2.msra.mxu0 0.0
    %132 = vmatprep.subr.mxu0 0.0
    %133 = vmatpush2.msra.mxu0 0.0
    %134 = vmatprep.subr.mxu0 0.0
    %135 = vmatpush2.msra.mxu0 0.0
    %136 = vmatprep.subr.mxu0 0.0
    %137 = vmatpush2.msra.mxu0 0.0
    %138 = vmatprep.subr.mxu0 0.0
    %139 = vmatpush2.msra.mxu0 0.0
    %140 = vmatprep.subr.mxu0 0.0
    %141 = vmatpush2.msra.mxu0 0.0
    %142 = vmatprep.subr.mxu0 0.0
    %143 = vmatpush2.msra.mxu0 0.0
    %144 = vmatprep.subr.mxu0 0.0
    %145 = vmatpush2.msra.mxu0 0.0
    %146 = vmatprep.subr.mxu0 0.0
    %147 = vmatpush2.msra.mxu0 0.0
    %148 = vmatprep.subr.mxu0 0.0
    %149 = vmatpush2.msra.mxu0 0.0
    %150 = vmatprep.subr.mxu0 0.0
    %151 = vmatpush2.msra.mxu0 0.0
    %152 = vmatprep.subr.mxu0 0.0
    %153 = vmatpush2.msra.mxu0 0.0
    %154 = vmatprep.subr.mxu0 0.0
    %155 = vmatpush2.msra.mxu0 0.0
    %156 = vmatprep.subr.mxu0 0.0
    %157 = vmatpush2.msra.mxu0 0.0
    %158 = vmatprep.subr.mxu0 0.0
    %159 = vmatpush2.msra.mxu0 0.0
    %160 = vmatprep.mubr.f32.mxu0 0.0
    %161 = vmatmul.mubr.f32.gmra.mxu0 %v94
    %v162 = vpop.f32.mrf.mxu0
    %v163 = vadd.f32 %v91, %v162
    %v164 = vpop.f32.mrf.mxu0
    %165 = vdwg.mxu0
    %v166 = vmin.f32 %v163, 0.0
    %v167 = vmul.f32 %v166, 0.5
    %v168 = vtanh.pop %v167
    %v169 = vmul.f32 %v166, 1.442695
    %v170 = vpow.pop %v169
    %v171 = vadd.f32 %v170, 1.0
    %v172 = vmul.f32 %v168, %v171
    %vm173 = vcmp.gt.f32.partialorder %v163, 0.0
    %v174 = vsel %vm173, %v163, %v172
    %v175 = vld [vmem:[#allocation7] sm:$0xff]
    %v176 = vld [vmem:[#allocation7 + $0x8] sm:$0xff]
    %v177 = vld [vmem:[#allocation7 + $0x10] sm:$0xff]
    %v178 = vld [vmem:[#allocation7 + $0x18] sm:$0xff]
    %v179 = vld [vmem:[#allocation7 + $0x20] sm:$0xff]
    %v180 = vld [vmem:[#allocation7 + $0x28] sm:$0xff]
    %v181 = vld [vmem:[#allocation7 + $0x30] sm:$0xff]
    %v182 = vld [vmem:[#allocation7 + $0x38] sm:$0xff]
    %v183 = vld [vmem:[#allocation7 + $0x40] sm:$0xff]
    %v184 = vld [vmem:[#allocation7 + $0x48] sm:$0xff]
    %v185 = vld [vmem:[#allocation7 + $0x50] sm:$0xff]
    %v186 = vld [vmem:[#allocation7 + $0x58] sm:$0xff]
    %v187 = vld [vmem:[#allocation7 + $0x60] sm:$0xff]
    %v188 = vld [vmem:[#allocation7 + $0x68] sm:$0xff]
    %v189 = vld [vmem:[#allocation7 + $0x70] sm:$0xff]
    %v190 = vld [vmem:[#allocation7 + $0x78] sm:$0xff]
    %v191 = vld [vmem:[%s4] sm:$0x1]
    %v193 = vlaneseq
    %v194 = vshrl.u32 %v193, 7
    %v195 = vsub.s32 0, %v194
    %v196 = vrot.slane %v191, %v195
    %198 = vmatprep.subr.mxu0 0.0
    %199 = vmatpush1.msra.mxu0 %v190
    %200 = vmatprep.subr.mxu0 0.0
    %201 = vmatpush1.msra.mxu0 %v189
    %202 = vmatprep.subr.mxu0 0.0
    %203 = vmatpush1.msra.mxu0 %v188
    %204 = vmatprep.subr.mxu0 0.0
    %205 = vmatpush1.msra.mxu0 %v187
    %206 = vmatprep.subr.mxu0 0.0
    %207 = vmatpush1.msra.mxu0 %v186
    %208 = vmatprep.subr.mxu0 0.0
    %209 = vmatpush1.msra.mxu0 %v185
    %210 = vmatprep.subr.mxu0 0.0
    %211 = vmatpush1.msra.mxu0 %v184
    %212 = vmatprep.subr.mxu0 0.0
    %213 = vmatpush1.msra.mxu0 %v183
    %214 = vmatprep.subr.mxu0 0.0
    %215 = vmatpush1.msra.mxu0 %v182
    %216 = vmatprep.subr.mxu0 0.0
    %217 = vmatpush1.msra.mxu0 %v181
    %218 = vmatprep.subr.mxu0 0.0
    %219 = vmatpush1.msra.mxu0 %v180
    %220 = vmatprep.subr.mxu0 0.0
    %221 = vmatpush1.msra.mxu0 %v179
    %222 = vmatprep.subr.mxu0 0.0
    %223 = vmatpush1.msra.mxu0 %v178
    %224 = vmatprep.subr.mxu0 0.0
    %225 = vmatpush1.msra.mxu0 %v177
    %226 = vmatprep.subr.mxu0 0.0
    %227 = vmatpush1.msra.mxu0 %v176
    %228 = vmatprep.subr.mxu0 0.0
    %229 = vmatpush1.msra.mxu0 %v175
    %230 = vmatprep.subr.mxu0 0.0
    %231 = vmatpush2.msra.mxu0 0.0
    %232 = vmatprep.subr.mxu0 0.0
    %233 = vmatpush2.msra.mxu0 0.0
    %234 = vmatprep.subr.mxu0 0.0
    %235 = vmatpush2.msra.mxu0 0.0
    %236 = vmatprep.subr.mxu0 0.0
    %237 = vmatpush2.msra.mxu0 0.0
    %238 = vmatprep.subr.mxu0 0.0
    %239 = vmatpush2.msra.mxu0 0.0
    %240 = vmatprep.subr.mxu0 0.0
    %241 = vmatpush2.msra.mxu0 0.0
    %242 = vmatprep.subr.mxu0 0.0
    %243 = vmatpush2.msra.mxu0 0.0
    %244 = vmatprep.subr.mxu0 0.0
    %245 = vmatpush2.msra.mxu0 0.0
    %246 = vmatprep.subr.mxu0 0.0
    %247 = vmatpush2.msra.mxu0 0.0
    %248 = vmatprep.subr.mxu0 0.0
    %249 = vmatpush2.msra.mxu0 0.0
    %250 = vmatprep.subr.mxu0 0.0
    %251 = vmatpush2.msra.mxu0 0.0
    %252 = vmatprep.subr.mxu0 0.0
    %253 = vmatpush2.msra.mxu0 0.0
    %254 = vmatprep.subr.mxu0 0.0
    %255 = vmatpush2.msra.mxu0 0.0
    %256 = vmatprep.subr.mxu0 0.0
    %257 = vmatpush2.msra.mxu0 0.0
    %258 = vmatprep.subr.mxu0 0.0
    %259 = vmatpush2.msra.mxu0 0.0
    %260 = vmatprep.subr.mxu0 0.0
    %261 = vmatpush2.msra.mxu0 0.0
    %262 = vmatprep.mubr.f32.mxu0 0.0
    %263 = vmatmul.mubr.f32.gmra.mxu0 %v174
    %v264 = vpop.f32.mrf.mxu0
    %v265 = vadd.f32 %v196, %v264
    %v266 = vpop.f32.mrf.mxu0
    %267 = vdwg.mxu0
    %v268 = vlaneseq
    %v269 = vand.u32 %v268, 127
    %vm270 = vcmp.lt.s32.totalorder %v269, 3
    %vm271 = vcmp.ge.s32.totalorder %v269, 3
    %vm272 = vcmp.lt.s32.totalorder %v269, 6
    %vm273 = vmand %vm271, %vm272
    %vm274 = vcmp.ge.s32.totalorder %v269, 6
    %vm275 = vcmp.lt.s32.totalorder %v269, 9
    %vm276 = vmand %vm274, %vm275
    %v277 = vsel %vm270, %v265, -1e+30
    %278 = vmax.xlane.f32.xlu0 %v277
    %v279 = vpop.xlane.xlu0 %278
    %v280 = vsub.f32 %v277, %v279
    %v281 = vmul.f32 %v280, 1.442695
    %v282 = vpow.pop %v281
    %283 = vadd.xlane.f32.xlu0 %v282
    %v284 = vpop.xlane.xlu0 %283
    %v285 = vrcp.pop %v284
    %v286 = vmul.f32 %v282, %v285
    %v287 = vmax.f32 %v265, -20.0
    %v288 = vmin.f32 %v287, 20.0
    %v289 = vmul.f32 %v288, 1.442695
    %v290 = vpow.pop %v289
    %v291 = vsel %vm276, %v290, 0.0
    %v292 = vsel %vm273, %v265, %v291
    %v293 = vsel %vm270, %v286, %v292
    %294 = vst [vmem:[#allocation8] sm:$0xff] %v293
    // Predicated region
    $region34: #{tpu_custom_call.1} parent=1 // pred_check
      _
    $region35: #{tpu_custom_call.1} parent=1 // pred_check_branch
      %296 = sbr.rel (0) target = $region37
    $region36: #{tpu_custom_call.1} parent=1 // pred_region
      %s298 = ssub.s32 128, 128
      %299 = vsyncadd [#allocation4], %s298
      %s301 = sshll.u32 [#allocation8], 4
      %s302 = int_to_ptr.vmem [resolvable:$true] %s301
      %304 = dma.vmem_to_hbm [thread:$0]  %s302, 128, %s5, [#allocation4]
    $region37: #{tpu_custom_call.1} parent=1 // pred_fallthru
      _
    // Predicated region
    $region38: #{tpu_custom_call.1} parent=1 // pred_check
      _
    $region39: #{tpu_custom_call.1} parent=1 // pred_check_branch
      %306 = sbr.rel (0) target = $region41
    $region40: #{tpu_custom_call.1} parent=1 // pred_region
      %307 = dma.done [#allocation4], 128
    $region41: #{tpu_custom_call.1} parent=1 // pred_fallthru
      _
    %308 = vsyncpa [#allocation3], 1
    %309 = vsyncpa [#allocation6], 1
    %310 = vsyncpa [#allocation4], 1

</llo_original>
